<compile_context>
chip_gen: v6e
topology: v6e:2x2x1
jax: 0.10.0
libtpu: 0.0.40
codegen_flags: <defaults>
</compile_context>

<pallas_src>
import jax
import jax.numpy as jnp
from jax.experimental import pallas as pl
from jax.experimental.pallas import tpu as pltpu


# ----------------------------------------------------------------------------
# Kernels
# ----------------------------------------------------------------------------

def _scores_softmax_context(w1q, w2v, vals, len_ref, vw_ref, ctx_ref, alpha_ref):
    """Shared tail: tanh -> score -> mask -> softmax -> context."""
    BB, T, H = vals.shape

    t = jnp.tanh(w1q[:, None, :] + w2v)                        # (BB, T, H) f32 (EUP)

    # Score projection V . tanh(...): VPU multiply + lane (XLU) reduction keeps
    # the softmax axis (T) on lanes -> no transpose before the softmax.
    # (The V bias is dropped: softmax is shift-invariant, it cannot affect
    #  alphas or the context.)
    scores = jnp.sum(t * vw_ref[...][None, :, :], axis=-1)     # (BB, T) f32

    # Padding mask rebuilt in-kernel from lengths (no dense mask DMA). Finite
    # fill keeps fully-masked rows NaN-free (uniform alphas).
    col = jax.lax.broadcasted_iota(jnp.int32, (BB, T), 1)
    scores = jnp.where(col < len_ref[...], scores, jnp.float32(-1e30))

    # Softmax over T (lane axis); reciprocal on the otherwise-idle EUP.
    m = jnp.max(scores, axis=-1, keepdims=True)
    e = jnp.exp(scores - m)
    alphas = e * pl.reciprocal(jnp.sum(e, axis=-1, keepdims=True), approx=True)

    # context = alphas @ values as a VPU multiply + sublane reduction over T
    # (f32 accumulate); avoids BB tiny M=1 MXU matmuls serialized by the MRF.
    ctx = jnp.sum(alphas[:, :, None] * vals.astype(jnp.float32), axis=1)  # (BB, H)

    ctx_ref[...] = ctx.astype(ctx_ref.dtype)
    alpha_ref[...] = alphas.astype(alpha_ref.dtype)


def _bahdanau_fused_kernel(q_ref, v_ref, len_ref,
                           w1_ref, w2_ref, b12_ref, vw_ref,
                           ctx_ref, alpha_ref):
    """Single-call mode: W2 @ values computed in-kernel (module semantics)."""
    BB, T, H = v_ref.shape
    vals = v_ref[...]                                          # (BB, T, H) bf16

    # Dominant GEMM for the whole batch block: (BB*T, H) @ (H, H), bf16 in,
    # f32 accumulation on the MXU.  T is padded to a multiple of 16 outside,
    # so this reshape is a free (sublane, lane) relabeling.
    w2v = jnp.dot(vals.reshape(BB * T, H), w2_ref[...],
                  preferred_element_type=jnp.float32).reshape(BB, T, H)

    # W1 @ query (both Linear biases folded into b12).
    w1q = jnp.dot(q_ref[...].astype(jnp.bfloat16), w1_ref[...],
                  preferred_element_type=jnp.float32) + b12_ref[...]   # (BB, H)

    _scores_softmax_context(w1q, w2v, vals, len_ref, vw_ref, ctx_ref, alpha_ref)


def _bahdanau_hoisted_kernel(q_ref, v_ref, w2v_ref, len_ref,
                             w1_ref, b12_ref, vw_ref,
                             ctx_ref, alpha_ref):
    """Decode-loop mode: query-independent W2 @ values streamed in (bf16)."""
    vals = v_ref[...]                                          # (BB, T, H) bf16
    w2v = w2v_ref[...].astype(jnp.float32)                     # (BB, T, H) f32
    w1q = jnp.dot(q_ref[...].astype(jnp.bfloat16), w1_ref[...],
                  preferred_element_type=jnp.float32) + b12_ref[...]   # (BB, H)
    _scores_softmax_context(w1q, w2v, vals, len_ref, vw_ref, ctx_ref, alpha_ref)


def _w2v_kernel(v_ref, w2_ref, o_ref):
    """Hoisted projection: w2v = values @ W2^T for one batch block."""
    BB, T, H = v_ref.shape
    o_ref[...] = jnp.dot(v_ref[...].reshape(BB * T, H), w2_ref[...],
                         preferred_element_type=jnp.float32
                         ).reshape(BB, T, H).astype(o_ref.dtype)


# ----------------------------------------------------------------------------
# Chip-aware tiling / VMEM configuration
# ----------------------------------------------------------------------------

def _chip_config():
    """VMEM / TensorCore-count dependent knobs, with a safe fallback.

    v5e/v6e: 128 MiB VMEM, 1 TC  -> single grid step, ~100 MiB limit.
    v7x    :  64 MiB per TC, 2 TC -> conservative 24 MiB picker budget,
              >= 2 grid steps so both TCs get work, <= 48 MiB limit.
    """
    vmem_bytes = None
    try:
        info = pltpu.get_tpu_info()
        vmem_bytes = int(getattr(info, "vmem_capacity_bytes"))
    except Exception:
        vmem_bytes = None
    if vmem_bytes is None or vmem_bytes <= 0:
        vmem_bytes = 64 * 1024 * 1024          # conservative fallback (v7x-like)

    if vmem_bytes <= 64 * 1024 * 1024:
        return {"num_cores": 2,
                "picker_budget_bytes": 24 * 1024 * 1024,
                "vmem_limit_bytes": 48 * 1024 * 1024}
    return {"num_cores": 1,
            "picker_budget_bytes": 96 * 1024 * 1024,
            "vmem_limit_bytes": 100 * 1024 * 1024}


def _pick_block_b(B, T, H, *, num_cores, vmem_budget_bytes):
    """Pick the per-step batch block BB.

    Per-item VMEM (dominant terms): two bf16 streamed tiles (values and,
    in decode mode, w2v), each double-buffered, plus ~4 f32 (T, H)
    intermediates.  BB must be a multiple of 8 (or the full batch) and divide
    B.  On multi-TensorCore chips prefer >= num_cores grid steps.
    """
    per_item = 2 * (2 * T * H * 2) + 4 * T * H * 4
    cap = max(1, vmem_budget_bytes // per_item)
    candidates = [bb for bb in range(8, B + 1, 8) if B % bb == 0 and bb <= cap]
    if num_cores >= 2:
        multi = [bb for bb in candidates if B // bb >= num_cores]
        if multi:
            return max(multi)
    if candidates:
        return max(candidates)
    return B


def _fixed_spec(arr):
    return pl.BlockSpec(arr.shape, lambda i, _nd=arr.ndim: (0,) * _nd)


# ----------------------------------------------------------------------------
# Wrappers
# ----------------------------------------------------------------------------

def precompute_w2_projection(values, params, block_b=None):
    """Query-independent W2 @ values projection, hoisted out of the decode loop.

    Returns a (B, T, H) bf16 array to pass as `precomputed_w2v=` to
    `bahdanau_attention`, so the per-timestep kernel skips the dominant
    O(T*H^2) MXU GEMM and its (BB, T, H) f32 intermediate.
    """
    B, T, H = values.shape
    cfg = _chip_config()
    T_pad = T + ((-T) % 16)

    vals = values.astype(jnp.bfloat16)
    if T_pad != T:
        vals = jnp.pad(vals, ((0, 0), (0, T_pad - T), (0, 0)))
    W2_t = params["W2"].T.astype(jnp.bfloat16)

    BB = block_b if block_b is not None else _pick_block_b(
        B, T_pad, H, num_cores=cfg["num_cores"],
        vmem_budget_bytes=cfg["picker_budget_bytes"])
    assert B % BB == 0 and (BB % 8 == 0 or BB == B), (B, BB)

    w2v = pl.pallas_call(
        _w2v_kernel,
        out_shape=jax.ShapeDtypeStruct((B, T_pad, H), jnp.bfloat16),
        grid_spec=pltpu.PrefetchScalarGridSpec(
            num_scalar_prefetch=0,
            grid=(B // BB,),
            in_specs=[pl.BlockSpec((BB, T_pad, H), lambda i: (i, 0, 0)),
                      _fixed_spec(W2_t)],
            out_specs=pl.BlockSpec((BB, T_pad, H), lambda i: (i, 0, 0)),
        ),
        compiler_params=pltpu.CompilerParams(
            dimension_semantics=("parallel",),
            vmem_limit_bytes=cfg["vmem_limit_bytes"]),
    )(vals, W2_t)
    return w2v[:, :T, :]


def bahdanau_attention(query, values, mask, params, block_b=None,
                       precomputed_w2v=None):
    """context (B,1,H), alphas (B,1,T) matching the PyTorch module's forward."""
    B, _, H = query.shape
    T = values.shape[1]

    cfg = _chip_config()
    # Pad T to a multiple of 16 so the bf16 in-kernel reshapes stay free
    # relabelings of the (sublane, lane) layout; pad columns are always masked.
    T_pad = T + ((-T) % 16)

    BB = block_b if block_b is not None else _pick_block_b(
        B, T_pad, H, num_cores=cfg["num_cores"],
        vmem_budget_bytes=cfg["picker_budget_bytes"])
    assert B % BB == 0 and (BB % 8 == 0 or BB == B), (B, BB)

    # Padding mask (1 = valid, 0 = pad) compressed to per-row valid lengths;
    # the kernel rebuilds it with an iota compare.  (Assumes the usual
    # left-aligned padding mask produced by the NMT encoder.)
    lengths = jnp.sum(mask != 0, axis=-1).astype(jnp.int32).reshape(B, 1)

    q2 = query.reshape(B, H)                                   # f32, cast in-kernel
    vals = values.astype(jnp.bfloat16)                         # (B, T, H)
    if T_pad != T:
        vals = jnp.pad(vals, ((0, 0), (0, T_pad - T), (0, 0)))

    W1_t = params["W1"].T.astype(jnp.bfloat16)                 # (H, H)
    b12 = (params["b1"] + params["b2"]).reshape(1, H).astype(jnp.float32)
    Vw = params["Vw"].reshape(1, H).astype(jnp.float32)
    # params["Vb"] intentionally unused: softmax is shift-invariant, so the
    # scalar V bias cannot affect alphas or the context.

    out_shape = (jax.ShapeDtypeStruct((B, H), query.dtype),
                 jax.ShapeDtypeStruct((B, T_pad), jnp.float32))
    out_specs = (pl.BlockSpec((BB, H), lambda i: (i, 0)),       # context
                 pl.BlockSpec((BB, T_pad), lambda i: (i, 0)))   # alphas
    compiler_params = pltpu.CompilerParams(
        dimension_semantics=("parallel",),
        vmem_limit_bytes=cfg["vmem_limit_bytes"])

    if precomputed_w2v is None:
        # Single-call forward: W2 @ values fused in-kernel.
        W2_t = params["W2"].T.astype(jnp.bfloat16)
        ctx, alphas = pl.pallas_call(
            _bahdanau_fused_kernel,
            out_shape=out_shape,
            grid_spec=pltpu.PrefetchScalarGridSpec(
                num_scalar_prefetch=0,
                grid=(B // BB,),
                in_specs=[
                    pl.BlockSpec((BB, H), lambda i: (i, 0)),          # query
                    pl.BlockSpec((BB, T_pad, H), lambda i: (i, 0, 0)),  # values
                    pl.BlockSpec((BB, 1), lambda i: (i, 0)),          # lengths
                    _fixed_spec(W1_t), _fixed_spec(W2_t),
                    _fixed_spec(b12), _fixed_spec(Vw),
                ],
                out_specs=out_specs),
            compiler_params=compiler_params,
        )(q2, vals, lengths, W1_t, W2_t, b12, Vw)
    else:
        # Decode-loop mode: stream the hoisted projection instead.
        w2v = precomputed_w2v.astype(jnp.bfloat16)
        if T_pad != T:
            w2v = jnp.pad(w2v, ((0, 0), (0, T_pad - T), (0, 0)))
        ctx, alphas = pl.pallas_call(
            _bahdanau_hoisted_kernel,
            out_shape=out_shape,
            grid_spec=pltpu.PrefetchScalarGridSpec(
                num_scalar_prefetch=0,
                grid=(B // BB,),
                in_specs=[
                    pl.BlockSpec((BB, H), lambda i: (i, 0)),            # query
                    pl.BlockSpec((BB, T_pad, H), lambda i: (i, 0, 0)),  # values
                    pl.BlockSpec((BB, T_pad, H), lambda i: (i, 0, 0)),  # w2v
                    pl.BlockSpec((BB, 1), lambda i: (i, 0)),            # lengths
                    _fixed_spec(W1_t), _fixed_spec(b12), _fixed_spec(Vw),
                ],
                out_specs=out_specs),
            compiler_params=compiler_params,
        )(q2, vals, w2v, lengths, W1_t, b12, Vw)

    # Restore the module's (B, 1, H) context / (B, 1, T) alphas shapes.
    return ctx.reshape(B, 1, H), alphas[:, :T].reshape(B, 1, T)


def bahdanau_reference(query, values, mask, params):
    W1, b1 = params["W1"], params["b1"]
    W2, b2 = params["W2"], params["b2"]
    Vw, Vb = params["Vw"], params["Vb"]
    s = jnp.tanh(query @ W1.T + b1 + values @ W2.T + b2) @ Vw.T + Vb   # (B, T, 1)
    s = jnp.swapaxes(s, 1, 2)                                          # (B, 1, T)
    s = jnp.where(mask[:, None, :] == 0, -jnp.inf, s)
    a = jax.nn.softmax(s, axis=-1)
    c = a @ values
    return c, a


if __name__ == "__main__":
    # Small, but exercises the batch-blocked grid and tile-aligned bf16 flatten.
    B, T, H = 16, 16, 32
    key = jax.random.PRNGKey(0)
    ks = jax.random.split(key, 9)
    bound = 1.0 / (H ** 0.5)
    params = {
        "W1": jax.random.uniform(ks[0], (H, H), jnp.float32, -bound, bound),
        "b1": jax.random.uniform(ks[1], (H,), jnp.float32, -bound, bound),
        "W2": jax.random.uniform(ks[2], (H, H), jnp.float32, -bound, bound),
        "b2": jax.random.uniform(ks[3], (H,), jnp.float32, -bound, bound),
        "Vw": jax.random.uniform(ks[4], (1, H), jnp.float32, -bound, bound),
        "Vb": jax.random.uniform(ks[5], (1,), jnp.float32, -bound, bound),
    }

    query = jax.random.normal(ks[6], (B, 1, H), jnp.float32)
    values = jax.random.normal(ks[7], (B, T, H), jnp.float32)
    lengths = jax.random.randint(ks[8], (B,), 1, T + 1)
    mask = (jnp.arange(T)[None, :] < lengths[:, None]).astype(jnp.float32)  # (B, T)

    # 1) Single-call forward (module semantics, W2@values fused in-kernel).
    ctx, alphas = bahdanau_attention(query, values, mask, params)
    jax.block_until_ready((ctx, alphas))

    # 2) Decode-loop mode: hoist the query-independent projection once and
    #    reuse it (the per-timestep kernel skips the dominant GEMM).
    w2v = precompute_w2_projection(values, params)
    ctx2, alphas2 = bahdanau_attention(query, values, mask, params,
                                       precomputed_w2v=w2v)
    jax.block_until_ready((ctx2, alphas2))

    ctx_ref, alphas_ref = bahdanau_reference(query, values, mask, params)
    assert ctx.shape == (B, 1, H) and alphas.shape == (B, 1, T)
    assert ctx2.shape == (B, 1, H) and alphas2.shape == (B, 1, T)

    # bf16 MXU operands (f32 accumulation) -> bf16-appropriate tolerance.
    for name, got, ref in (("alphas", alphas, alphas_ref),
                           ("ctx", ctx, ctx_ref),
                           ("alphas_hoisted", alphas2, alphas_ref),
                           ("ctx_hoisted", ctx2, ctx_ref)):
        assert jnp.allclose(got, ref, atol=3e-2, rtol=3e-2), (
            name, float(jnp.max(jnp.abs(got - ref))))
    print("KERNEL_OK")
</pallas_src>

<mosaic_0001>
module attributes {stable_mosaic.version = 11 : i64} {
  func.func @_bahdanau_fused_kernel(%arg0: i32, %arg1: memref<8x32xf32, #tpu.memory_space<vmem>>, %arg2: memref<8x16x32xbf16, #tpu.memory_space<vmem>>, %arg3: memref<8x1xi32, #tpu.memory_space<vmem>>, %arg4: memref<32x32xbf16, #tpu.memory_space<vmem>>, %arg5: memref<32x32xbf16, #tpu.memory_space<vmem>>, %arg6: memref<1x32xf32, #tpu.memory_space<vmem>>, %arg7: memref<1x32xf32, #tpu.memory_space<vmem>>, %arg8: memref<8x32xf32, #tpu.memory_space<vmem>>, %arg9: memref<8x16xf32, #tpu.memory_space<vmem>>) attributes {dimension_semantics = [#tpu.dimension_semantics<parallel>], iteration_bounds = array<i64: 2>, scalar_prefetch = 0 : i64, scratch_operands = 0 : i64, tpu.core_type = #tpu.core_type<tc>, window_params = [{transform_indices = @transform_0, window_bounds = array<i64: 8, 32>}, {transform_indices = @transform_1, window_bounds = array<i64: 8, 16, 32>}, {transform_indices = @transform_2, window_bounds = array<i64: 8, 1>}, {pipeline_mode = #tpu.pipeline_mode<synchronous>, transform_indices = @transform_3, window_bounds = array<i64: 32, 32>}, {pipeline_mode = #tpu.pipeline_mode<synchronous>, transform_indices = @transform_4, window_bounds = array<i64: 32, 32>}, {pipeline_mode = #tpu.pipeline_mode<synchronous>, transform_indices = @transform_5, window_bounds = array<i64: 1, 32>}, {pipeline_mode = #tpu.pipeline_mode<synchronous>, transform_indices = @transform_6, window_bounds = array<i64: 1, 32>}, {transform_indices = @transform_7, window_bounds = array<i64: 8, 32>}, {transform_indices = @transform_8, window_bounds = array<i64: 8, 16>}]} {
    %c0 = arith.constant 0 : index
    %c0_0 = arith.constant 0 : index
    %c0_1 = arith.constant 0 : index
    %0 = vector.load %arg2[%c0, %c0_0, %c0_1] : memref<8x16x32xbf16, #tpu.memory_space<vmem>>, vector<8x16x32xbf16>
    %1 = vector.shape_cast %0 : vector<8x16x32xbf16> to vector<128x32xbf16>
    %c0_2 = arith.constant 0 : index
    %c0_3 = arith.constant 0 : index
    %2 = vector.load %arg5[%c0_2, %c0_3] : memref<32x32xbf16, #tpu.memory_space<vmem>>, vector<32x32xbf16>
    %cst = arith.constant dense<0.000000e+00> : vector<128x32xf32>
    %3 = tpu.matmul %1, %2, %cst {dimension_numbers = #tpu.dot_dimension_numbers<[1], [0], [0], [1], [0, 0, 1, 1], [], []>} : vector<128x32xbf16>, vector<32x32xbf16>, vector<128x32xf32> -> vector<128x32xf32>
    %4 = vector.shape_cast %3 : vector<128x32xf32> to vector<8x16x32xf32>
    %c0_4 = arith.constant 0 : index
    %c0_5 = arith.constant 0 : index
    %5 = vector.load %arg1[%c0_4, %c0_5] : memref<8x32xf32, #tpu.memory_space<vmem>>, vector<8x32xf32>
    %6 = arith.truncf %5 : vector<8x32xf32> to vector<8x32xbf16>
    %c0_6 = arith.constant 0 : index
    %c0_7 = arith.constant 0 : index
    %7 = vector.load %arg4[%c0_6, %c0_7] : memref<32x32xbf16, #tpu.memory_space<vmem>>, vector<32x32xbf16>
    %cst_8 = arith.constant dense<0.000000e+00> : vector<8x32xf32>
    %8 = tpu.matmul %6, %7, %cst_8 {dimension_numbers = #tpu.dot_dimension_numbers<[1], [0], [0], [1], [0, 0, 1, 1], [], []>} : vector<8x32xbf16>, vector<32x32xbf16>, vector<8x32xf32> -> vector<8x32xf32>
    %c0_9 = arith.constant 0 : index
    %c0_10 = arith.constant 0 : index
    %9 = vector.load %arg6[%c0_9, %c0_10] : memref<1x32xf32, #tpu.memory_space<vmem>>, vector<1x32xf32>
    %10 = vector.broadcast %9 : vector<1x32xf32> to vector<8x32xf32>
    %11 = arith.addf %8, %10 : vector<8x32xf32>
    %12 = vector.shape_cast %11 : vector<8x32xf32> to vector<8x1x32xf32>
    %13 = vector.broadcast %12 : vector<8x1x32xf32> to vector<8x16x32xf32>
    %14 = arith.addf %13, %4 : vector<8x16x32xf32>
    %15 = math.tanh %14 : vector<8x16x32xf32>
    %c0_11 = arith.constant 0 : index
    %c0_12 = arith.constant 0 : index
    %16 = vector.load %arg7[%c0_11, %c0_12] : memref<1x32xf32, #tpu.memory_space<vmem>>, vector<1x32xf32>
    %17 = vector.shape_cast %16 : vector<1x32xf32> to vector<1x1x32xf32>
    %18 = vector.broadcast %17 : vector<1x1x32xf32> to vector<8x16x32xf32>
    %19 = arith.mulf %15, %18 : vector<8x16x32xf32>
    %cst_13 = arith.constant dense<0.000000e+00> : vector<8x16xf32>
    %20 = vector.multi_reduction <add>, %19, %cst_13 [2] : vector<8x16x32xf32> to vector<8x16xf32>
    %21 = tpu.iota {dimensions = array<i32: 1>} : vector<8x16xi32>
    %c0_14 = arith.constant 0 : index
    %c0_15 = arith.constant 0 : index
    %22 = vector.load %arg3[%c0_14, %c0_15] : memref<8x1xi32, #tpu.memory_space<vmem>>, vector<8x1xi32>
    %23 = vector.broadcast %22 : vector<8x1xi32> to vector<8x16xi32>
    %24 = arith.cmpi slt, %21, %23 : vector<8x16xi32>
    %cst_16 = arith.constant -1.000000e+30 : f32
    %25 = vector.broadcast %cst_16 : f32 to vector<8x16xf32>
    %26 = arith.select %24, %20, %25 : vector<8x16xi1>, vector<8x16xf32>
    %cst_17 = arith.constant dense<0xFF800000> : vector<8xf32>
    %27 = vector.multi_reduction <maximumf>, %26, %cst_17 [1] : vector<8x16xf32> to vector<8xf32>
    %28 = vector.shape_cast %27 : vector<8xf32> to vector<8x1xf32>
    %29 = vector.broadcast %28 : vector<8x1xf32> to vector<8x16xf32>
    %30 = arith.subf %26, %29 : vector<8x16xf32>
    %31 = math.exp %30 : vector<8x16xf32>
    %cst_18 = arith.constant dense<0.000000e+00> : vector<8xf32>
    %32 = vector.multi_reduction <add>, %31, %cst_18 [1] : vector<8x16xf32> to vector<8xf32>
    %33 = vector.shape_cast %32 : vector<8xf32> to vector<8x1xf32>
    %34 = tpu.reciprocal %33 {approx = true} : vector<8x1xf32> -> vector<8x1xf32>
    %35 = vector.broadcast %34 : vector<8x1xf32> to vector<8x16xf32>
    %36 = arith.mulf %31, %35 : vector<8x16xf32>
    %37 = vector.shape_cast %36 : vector<8x16xf32> to vector<8x16x1xf32>
    %38 = arith.extf %0 : vector<8x16x32xbf16> to vector<8x16x32xf32>
    %39 = vector.broadcast %37 : vector<8x16x1xf32> to vector<8x16x32xf32>
    %40 = arith.mulf %39, %38 : vector<8x16x32xf32>
    %cst_19 = arith.constant dense<0.000000e+00> : vector<8x32xf32>
    %41 = vector.multi_reduction <add>, %40, %cst_19 [1] : vector<8x16x32xf32> to vector<8x32xf32>
    %c0_20 = arith.constant 0 : index
    %c0_21 = arith.constant 0 : index
    %42 = vector.load %arg8[%c0_20, %c0_21] : memref<8x32xf32, #tpu.memory_space<vmem>>, vector<8x32xf32>
    tpu.vector_store %arg8[%c0_20, %c0_21], %41 {strides = array<i32>} : memref<8x32xf32, #tpu.memory_space<vmem>>, vector<8x32xf32>,
    %c0_22 = arith.constant 0 : index
    %c0_23 = arith.constant 0 : index
    %43 = vector.load %arg9[%c0_22, %c0_23] : memref<8x16xf32, #tpu.memory_space<vmem>>, vector<8x16xf32>
    tpu.vector_store %arg9[%c0_22, %c0_23], %36 {strides = array<i32>} : memref<8x16xf32, #tpu.memory_space<vmem>>, vector<8x16xf32>,
    return
  }
  func.func @transform_0(%arg0: i32) -> (i32, i32) {
    %c0_i32 = arith.constant 0 : i32
    %c0_i32_0 = arith.constant 0 : i32
    return %arg0, %c0_i32 : i32, i32
  }
  func.func @transform_1(%arg0: i32) -> (i32, i32, i32) {
    %c0_i32 = arith.constant 0 : i32
    %c0_i32_0 = arith.constant 0 : i32
    %c0_i32_1 = arith.constant 0 : i32
    return %arg0, %c0_i32, %c0_i32_0 : i32, i32, i32
  }
  func.func @transform_2(%arg0: i32) -> (i32, i32) {
    %c0_i32 = arith.constant 0 : i32
    %c0_i32_0 = arith.constant 0 : i32
    return %arg0, %c0_i32 : i32, i32
  }
  func.func @transform_3(%arg0: i32) -> (i32, i32) {
    %c0_i32 = arith.constant 0 : i32
    %c0_i32_0 = arith.constant 0 : i32
    %c0_i32_1 = arith.constant 0 : i32
    return %c0_i32, %c0_i32_0 : i32, i32
  }
  func.func @transform_4(%arg0: i32) -> (i32, i32) {
    %c0_i32 = arith.constant 0 : i32
    %c0_i32_0 = arith.constant 0 : i32
    %c0_i32_1 = arith.constant 0 : i32
    return %c0_i32, %c0_i32_0 : i32, i32
  }
  func.func @transform_5(%arg0: i32) -> (i32, i32) {
    %c0_i32 = arith.constant 0 : i32
    %c0_i32_0 = arith.constant 0 : i32
    %c0_i32_1 = arith.constant 0 : i32
    return %c0_i32, %c0_i32_0 : i32, i32
  }
  func.func @transform_6(%arg0: i32) -> (i32, i32) {
    %c0_i32 = arith.constant 0 : i32
    %c0_i32_0 = arith.constant 0 : i32
    %c0_i32_1 = arith.constant 0 : i32
    return %c0_i32, %c0_i32_0 : i32, i32
  }
  func.func @transform_7(%arg0: i32) -> (i32, i32) {
    %c0_i32 = arith.constant 0 : i32
    %c0_i32_0 = arith.constant 0 : i32
    return %arg0, %c0_i32 : i32, i32
  }
  func.func @transform_8(%arg0: i32) -> (i32, i32) {
    %c0_i32 = arith.constant 0 : i32
    %c0_i32_0 = arith.constant 0 : i32
    return %arg0, %c0_i32 : i32, i32
  }
}

</mosaic_0001>

<llo_original>
// kernel: tpu_custom_call.1
$region0: #{tpu_custom_call.1}
  #allocation0 [shape = 'u32[]', space=smem, size = 0x4, offset = 0x4, fixed_abs, tag = 'smem constant byte address 0x4 - core index']
  #allocation1 [shape = 'u32[144,128]{1,0:T(1,128)}', space=vmem, size = 0x12000, scoped, tag = 'internal scratch']
  %s0 = inlined_call_operand.vmem [shape: f32[16,32], index: 0, kind: input, shape index: {}]
  %s1 = inlined_call_operand.hbm [shape: bf16[16,16,32], index: 1, kind: input, shape index: {}]
  %s2 = inlined_call_operand.vmem [shape: s32[16,1], index: 2, kind: input, shape index: {}]
  %s3 = inlined_call_operand.hbm [shape: bf16[32,32], index: 3, kind: input, shape index: {}]
  %s4 = inlined_call_operand.hbm [shape: bf16[32,32], index: 4, kind: input, shape index: {}]
  %s5 = inlined_call_operand.vmem [shape: f32[1,32], index: 5, kind: input, shape index: {}]
  %s6 = inlined_call_operand.vmem [shape: f32[1,32], index: 6, kind: input, shape index: {}]
  %s7 = inlined_call_operand.hbm [shape: f32[16,32], index: 7, kind: output, shape index: {0}]
  %s8 = inlined_call_operand.hbm [shape: f32[16,16], index: 8, kind: output, shape index: {1}]
  %9 = xla_tuple %s7, %s8
  %s10 = sld [smem:[#allocation0]]
  $region81: #{tpu_custom_call.1} parent=0
    _
  %s12 = ssub.s32 1, %s10
  %s13 = scalar_select 0, %s12, %s10
  $region1: #{tpu_custom_call.1} parent=0
    #allocation2 [shape = 'u8[65536]{0}', space=vmem, size = 0x10000, scoped, tag = 'input window, operand 1']
    #allocation3 [shape = 's32[2]{0}', space=sflag, size = 0x8, scoped, tag = 'scoped memory for tpu_custom_call.1']
    #allocation4 [shape = 's32[2]{0}', space=sflag, size = 0x8, scoped, tag = 'scoped memory for tpu_custom_call.1']
    #allocation5 [shape = 'u8[8192]{0}', space=vmem, size = 0x2000, scoped, tag = 'input window, operand 3, single buffered']
    #allocation6 [shape = 's32[1]{0}', space=sflag, size = 0x4, scoped, tag = 'scoped memory for tpu_custom_call.1']
    #allocation7 [shape = 'u8[8192]{0}', space=vmem, size = 0x2000, scoped, tag = 'input window, operand 4, single buffered']
    #allocation8 [shape = 'u8[8192]{0}', space=vmem, size = 0x2000, scoped, tag = 'output window, operand 0']
    #allocation9 [shape = 'u8[8192]{0}', space=vmem, size = 0x2000, scoped, tag = 'output window, operand 1']
    #allocation10 [shape = 's32[2]{0}', space=sflag, size = 0x8, scoped, tag = 'scoped memory for tpu_custom_call.1']
    %14 = vsyncpa [#allocation3], 0
    %s15 = scalar_lea.sflag [#allocation3], 1
    %16 = vsyncpa %s15, 0
    %17 = vsyncpa [#allocation6], 0
    %18 = vsyncpa [#allocation4], 0
    %s19 = scalar_lea.sflag [#allocation4], 1
    %20 = vsyncpa %s19, 0
    %21 = vsyncpa [#allocation10], 0
    %s22 = scalar_lea.sflag [#allocation10], 1
    %23 = vsyncpa %s22, 0
    loop: start=0, step=1, limit=4
    $region2: #{tpu_custom_call.1} parent=1 // loop_pre_header
      _
    $region3: #{tpu_custom_call.1} parent=1 // loop_header
      %s25 = sphi 0, %s29
      %p26 = scmp.ge.s32.totalorder %s25, 4
      %s35 = sphi 0, %s37
      %s38 = sphi 0, %s35
      %s39 = sphi 0, %s38
      %s55 = sphi 0, %s39
      %s61 = sphi 0, %s63
      %s64 = sphi 0, %s61
      %s65 = sphi 0, %s64
      %s81 = sphi 0, %s65
      %s87 = sphi 0, %s89
      %s90 = sphi 0, %s87
      %s91 = sphi 0, %s90
      %s107 = sphi 0, %s91
      %s111 = sphi 0, %s111
      %s113 = sphi 0, %s111
      %s114 = sphi 0, %s113
      %s128 = sphi 0, %s114
      %s132 = sphi 0, %s132
      %s134 = sphi 0, %s132
      %s135 = sphi 0, %s134
      %s149 = sphi 0, %s135
      %s153 = sphi 0, %s153
      %s155 = sphi 0, %s153
      %s156 = sphi 0, %s155
      %s170 = sphi 0, %s156
      %s174 = sphi 0, %s174
      %s176 = sphi 0, %s174
      %s177 = sphi 0, %s176
      %s191 = sphi 0, %s177
      %s197 = sphi 0, %s199
      %s200 = sphi 0, %s197
      %s201 = sphi 0, %s200
      %s217 = sphi 0, %s201
      %s223 = sphi 0, %s225
      %s226 = sphi 0, %s223
      %s227 = sphi 0, %s226
      %s243 = sphi 0, %s227
    $region4: #{tpu_custom_call.1} parent=1 // loop_header_branch
      %28 = sbr.rel (%p26) target = $region8
    $region5: #{tpu_custom_call.1} parent=1 // loop_body
      %s30 = ssub.s32 %s25, 1
      %s31 = ssub.s32 %s25, 2
      %s32 = sadd.s32 %s25, 1
      %s33 = ssub.s32 %s25, %s32
      %p34 = scmp.eq.s32.totalorder %s33, 0
      %s36 = sadd.s32 %s35, 1
      %s37 = scalar_select %p34, %s35, %s36
      %p40 = pneg %p34
      %p41 = scmp.eq.s32.totalorder %s25, 1
      %p42 = por %p40, %p41
      %p43 = scmp.ne.s32.totalorder %s35, %s38
      %p44 = scmp.eq.s32.totalorder %s25, 0
      %p45 = por %p43, %p44
      %p46 = scmp.ne.s32.totalorder %s35, %s38
      %p47 = scmp.eq.s32.totalorder %s30, 1
      %p48 = por %p46, %p47
      %p49 = scmp.ne.s32.totalorder %s38, %s39
      %p50 = scmp.eq.s32.totalorder %s30, 0
      %p51 = por %p49, %p50
      %p52 = scmp.ne.s32.totalorder %s38, %s39
      %p53 = scmp.eq.s32.totalorder %s31, 1
      %p54 = por %p52, %p53
      %p56 = scmp.ne.s32.totalorder %s39, %s55
      %p57 = scmp.eq.s32.totalorder %s31, 0
      %p58 = por %p56, %p57
      %s59 = ssub.s32 %s25, %s32
      %p60 = scmp.eq.s32.totalorder %s59, 0
      %s62 = sadd.s32 %s61, 1
      %s63 = scalar_select %p60, %s61, %s62
      %p66 = pneg %p60
      %p67 = scmp.eq.s32.totalorder %s25, 1
      %p68 = por %p66, %p67
      %p69 = scmp.ne.s32.totalorder %s61, %s64
      %p70 = scmp.eq.s32.totalorder %s25, 0
      %p71 = por %p69, %p70
      %p72 = scmp.ne.s32.totalorder %s61, %s64
      %p73 = scmp.eq.s32.totalorder %s30, 1
      %p74 = por %p72, %p73
      %p75 = scmp.ne.s32.totalorder %s64, %s65
      %p76 = scmp.eq.s32.totalorder %s30, 0
      %p77 = por %p75, %p76
      %p78 = scmp.ne.s32.totalorder %s64, %s65
      %p79 = scmp.eq.s32.totalorder %s31, 1
      %p80 = por %p78, %p79
      %p82 = scmp.ne.s32.totalorder %s65, %s81
      %p83 = scmp.eq.s32.totalorder %s31, 0
      %p84 = por %p82, %p83
      %s85 = ssub.s32 %s25, %s32
      %p86 = scmp.eq.s32.totalorder %s85, 0
      %s88 = sadd.s32 %s87, 1
      %s89 = scalar_select %p86, %s87, %s88
      %p92 = pneg %p86
      %p93 = scmp.eq.s32.totalorder %s25, 1
      %p94 = por %p92, %p93
      %p95 = scmp.ne.s32.totalorder %s87, %s90
      %p96 = scmp.eq.s32.totalorder %s25, 0
      %p97 = por %p95, %p96
      %p98 = scmp.ne.s32.totalorder %s87, %s90
      %p99 = scmp.eq.s32.totalorder %s30, 1
      %p100 = por %p98, %p99
      %p101 = scmp.ne.s32.totalorder %s90, %s91
      %p102 = scmp.eq.s32.totalorder %s30, 0
      %p103 = por %p101, %p102
      %p104 = scmp.ne.s32.totalorder %s90, %s91
      %p105 = scmp.eq.s32.totalorder %s31, 1
      %p106 = por %p104, %p105
      %p108 = scmp.ne.s32.totalorder %s91, %s107
      %p109 = scmp.eq.s32.totalorder %s31, 0
      %p110 = por %p108, %p109
      %s112 = sadd.s32 %s111, 1
      %p115 = scmp.eq.s32.totalorder %s25, 1
      %p116 = scmp.ne.s32.totalorder %s111, %s113
      %p117 = scmp.eq.s32.totalorder %s25, 0
      %p118 = por %p116, %p117
      %p119 = scmp.ne.s32.totalorder %s111, %s113
      %p120 = scmp.eq.s32.totalorder %s30, 1
      %p121 = por %p119, %p120
      %p122 = scmp.ne.s32.totalorder %s113, %s114
      %p123 = scmp.eq.s32.totalorder %s30, 0
      %p124 = por %p122, %p123
      %p125 = scmp.ne.s32.totalorder %s113, %s114
      %p126 = scmp.eq.s32.totalorder %s31, 1
      %p127 = por %p125, %p126
      %p129 = scmp.ne.s32.totalorder %s114, %s128
      %p130 = scmp.eq.s32.totalorder %s31, 0
      %p131 = por %p129, %p130
      %s133 = sadd.s32 %s132, 1
      %p136 = scmp.eq.s32.totalorder %s25, 1
      %p137 = scmp.ne.s32.totalorder %s132, %s134
      %p138 = scmp.eq.s32.totalorder %s25, 0
      %p139 = por %p137, %p138
      %p140 = scmp.ne.s32.totalorder %s132, %s134
      %p141 = scmp.eq.s32.totalorder %s30, 1
      %p142 = por %p140, %p141
      %p143 = scmp.ne.s32.totalorder %s134, %s135
      %p144 = scmp.eq.s32.totalorder %s30, 0
      %p145 = por %p143, %p144
      %p146 = scmp.ne.s32.totalorder %s134, %s135
      %p147 = scmp.eq.s32.totalorder %s31, 1
      %p148 = por %p146, %p147
      %p150 = scmp.ne.s32.totalorder %s135, %s149
      %p151 = scmp.eq.s32.totalorder %s31, 0
      %p152 = por %p150, %p151
      %s154 = sadd.s32 %s153, 1
      %p157 = scmp.eq.s32.totalorder %s25, 1
      %p158 = scmp.ne.s32.totalorder %s153, %s155
      %p159 = scmp.eq.s32.totalorder %s25, 0
      %p160 = por %p158, %p159
      %p161 = scmp.ne.s32.totalorder %s153, %s155
      %p162 = scmp.eq.s32.totalorder %s30, 1
      %p163 = por %p161, %p162
      %p164 = scmp.ne.s32.totalorder %s155, %s156
      %p165 = scmp.eq.s32.totalorder %s30, 0
      %p166 = por %p164, %p165
      %p167 = scmp.ne.s32.totalorder %s155, %s156
      %p168 = scmp.eq.s32.totalorder %s31, 1
      %p169 = por %p167, %p168
      %p171 = scmp.ne.s32.totalorder %s156, %s170
      %p172 = scmp.eq.s32.totalorder %s31, 0
      %p173 = por %p171, %p172
      %s175 = sadd.s32 %s174, 1
      %p178 = scmp.eq.s32.totalorder %s25, 1
      %p179 = scmp.ne.s32.totalorder %s174, %s176
      %p180 = scmp.eq.s32.totalorder %s25, 0
      %p181 = por %p179, %p180
      %p182 = scmp.ne.s32.totalorder %s174, %s176
      %p183 = scmp.eq.s32.totalorder %s30, 1
      %p184 = por %p182, %p183
      %p185 = scmp.ne.s32.totalorder %s176, %s177
      %p186 = scmp.eq.s32.totalorder %s30, 0
      %p187 = por %p185, %p186
      %p188 = scmp.ne.s32.totalorder %s176, %s177
      %p189 = scmp.eq.s32.totalorder %s31, 1
      %p190 = por %p188, %p189
      %p192 = scmp.ne.s32.totalorder %s177, %s191
      %p193 = scmp.eq.s32.totalorder %s31, 0
      %p194 = por %p192, %p193
      %s195 = ssub.s32 %s25, %s32
      %p196 = scmp.eq.s32.totalorder %s195, 0
      %s198 = sadd.s32 %s197, 1
      %s199 = scalar_select %p196, %s197, %s198
      %p202 = pneg %p196
      %p203 = scmp.eq.s32.totalorder %s25, 1
      %p204 = por %p202, %p203
      %p205 = scmp.ne.s32.totalorder %s197, %s200
      %p206 = scmp.eq.s32.totalorder %s25, 0
      %p207 = por %p205, %p206
      %p208 = scmp.ne.s32.totalorder %s197, %s200
      %p209 = scmp.eq.s32.totalorder %s30, 1
      %p210 = por %p208, %p209
      %p211 = scmp.ne.s32.totalorder %s200, %s201
      %p212 = scmp.eq.s32.totalorder %s30, 0
      %p213 = por %p211, %p212
      %p214 = scmp.ne.s32.totalorder %s200, %s201
      %p215 = scmp.eq.s32.totalorder %s31, 1
      %p216 = por %p214, %p215
      %p218 = scmp.ne.s32.totalorder %s201, %s217
      %p219 = scmp.eq.s32.totalorder %s31, 0
      %p220 = por %p218, %p219
      %s221 = ssub.s32 %s25, %s32
      %p222 = scmp.eq.s32.totalorder %s221, 0
      %s224 = sadd.s32 %s223, 1
      %s225 = scalar_select %p222, %s223, %s224
      %p228 = pneg %p222
      %p229 = scmp.eq.s32.totalorder %s25, 1
      %p230 = por %p228, %p229
      %p231 = scmp.ne.s32.totalorder %s223, %s226
      %p232 = scmp.eq.s32.totalorder %s25, 0
      %p233 = por %p231, %p232
      %p234 = scmp.ne.s32.totalorder %s223, %s226
      %p235 = scmp.eq.s32.totalorder %s30, 1
      %p236 = por %p234, %p235
      %p237 = scmp.ne.s32.totalorder %s226, %s227
      %p238 = scmp.eq.s32.totalorder %s30, 0
      %p239 = por %p237, %p238
      %p240 = scmp.ne.s32.totalorder %s226, %s227
      %p241 = scmp.eq.s32.totalorder %s31, 1
      %p242 = por %p240, %p241
      %p244 = scmp.ne.s32.totalorder %s227, %s243
      %p245 = scmp.eq.s32.totalorder %s31, 0
      %p246 = por %p244, %p245
      %p247 = scmp.le.s32.totalorder 1, %s25
      %p248 = scmp.lt.s32.totalorder %s25, 3
      %p249 = pnand %p247, %p248
      %p250 = pneg %p249
      // Predicated region
      $region9: #{tpu_custom_call.1} parent=5 // pred_check
        _
      $region10: #{tpu_custom_call.1} parent=5 // pred_check_branch
        %252 = sbr.rel (%p249) target = $region12
      $region11: #{tpu_custom_call.1} parent=5 // pred_region
        %s253 = ssub.s32 %s25, 1
        // Predicated region
        $region13: #{tpu_custom_call.1} parent=11 // pred_check
          %p254 = pneg %p124
        $region14: #{tpu_custom_call.1} parent=11 // pred_check_branch
          %256 = sbr.rel (%p254) target = $region16
        $region15: #{tpu_custom_call.1} parent=11 // pred_region
          %s258 = ssub.s32 256, 256
          %259 = vsyncadd [#allocation6], %s258
          %s260 = sshll.u32 [#allocation5], 4
          %s261 = int_to_ptr.vmem [resolvable:$true] %s260
          %266 = dma.hbm_to_vmem [thread:$0]  %s3, 256, %s261, [#allocation6], 64, 64, 4
        $region16: #{tpu_custom_call.1} parent=11 // pred_fallthru
          _
        // Predicated region
        $region17: #{tpu_custom_call.1} parent=11 // pred_check
          %p267 = pneg %p145
        $region18: #{tpu_custom_call.1} parent=11 // pred_check_branch
          %269 = sbr.rel (%p267) target = $region20
        $region19: #{tpu_custom_call.1} parent=11 // pred_region
          %s271 = ssub.s32 256, 256
          %272 = vsyncadd [#allocation6], %s271
          %s273 = sshll.u32 [#allocation7], 4
          %s274 = int_to_ptr.vmem [resolvable:$true] %s273
          %279 = dma.hbm_to_vmem [thread:$0]  %s4, 256, %s274, [#allocation6], 64, 64, 4
        $region20: #{tpu_custom_call.1} parent=11 // pred_fallthru
          _
        // Predicated region
        $region21: #{tpu_custom_call.1} parent=11 // pred_check
          %p280 = pneg %p166
        $region22: #{tpu_custom_call.1} parent=11 // pred_check_branch
          %282 = sbr.rel (%p280) target = $region24
        $region23: #{tpu_custom_call.1} parent=11 // pred_region
          _
        $region24: #{tpu_custom_call.1} parent=11 // pred_fallthru
          _
        // Predicated region
        $region25: #{tpu_custom_call.1} parent=11 // pred_check
          %p283 = pneg %p187
        $region26: #{tpu_custom_call.1} parent=11 // pred_check_branch
          %285 = sbr.rel (%p283) target = $region28
        $region27: #{tpu_custom_call.1} parent=11 // pred_region
          _
        $region28: #{tpu_custom_call.1} parent=11 // pred_fallthru
          _
      $region12: #{tpu_custom_call.1} parent=5 // pred_fallthru
        _
      %p286 = scmp.lt.s32.totalorder %s25, 2
      // Predicated region
      $region29: #{tpu_custom_call.1} parent=5 // pred_check
        %p287 = pneg %p286
      $region30: #{tpu_custom_call.1} parent=5 // pred_check_branch
        %289 = sbr.rel (%p287) target = $region32
      $region31: #{tpu_custom_call.1} parent=5 // pred_region
        // Predicated region
        $region33: #{tpu_custom_call.1} parent=31 // pred_check
          %p290 = pneg %p45
        $region34: #{tpu_custom_call.1} parent=31 // pred_check_branch
          %292 = sbr.rel (%p290) target = $region36
        $region35: #{tpu_custom_call.1} parent=31 // pred_region
          %p293 = scmp.lt.s32.totalorder %s25, 1
          %s294 = scalar_select %p293, %s25, 1
          %s295 = smul.addr %s294, 8
          %s296 = scalar_lea.vmem %s0, %s295
        $region36: #{tpu_custom_call.1} parent=31 // pred_fallthru
          _
        // Predicated region
        $region37: #{tpu_custom_call.1} parent=31 // pred_check
          %p297 = pneg %p71
        $region38: #{tpu_custom_call.1} parent=31 // pred_check_branch
          %299 = sbr.rel (%p297) target = $region40
        $region39: #{tpu_custom_call.1} parent=31 // pred_region
          %s300 = sand.u32 %s61, 1
          %s301 = scalar_lea.sflag [#allocation3], %s300
          %s302 = sand.u32 %s61, 1
          %s303 = smul.addr %s302, 64
          %s304 = scalar_lea.vmem [#allocation2], %s303
          %s305 = smul.u32 8, %s25
          %s307 = ssub.s32 1024, 1024
          %308 = vsyncadd %s301, %s307
          %s309 = smul.addr %s305, 2
          %s310 = smul.addr %s309, 64
          %s311 = scalar_lea.hbm %s1, %s310
          %s312 = sshll.u32 %s304, 4
          %s313 = int_to_ptr.vmem [resolvable:$true] %s312
          %318 = dma.hbm_to_vmem [thread:$0]  %s311, 1024, %s313, %s301, 64, 64, 4
        $region40: #{tpu_custom_call.1} parent=31 // pred_fallthru
          _
        // Predicated region
        $region41: #{tpu_custom_call.1} parent=31 // pred_check
          %p319 = pneg %p97
        $region42: #{tpu_custom_call.1} parent=31 // pred_check_branch
          %321 = sbr.rel (%p319) target = $region44
        $region43: #{tpu_custom_call.1} parent=31 // pred_region
          %p322 = scmp.lt.s32.totalorder %s25, 1
          %s323 = scalar_select %p322, %s25, 1
          %s324 = smul.addr %s323, 8
          %s325 = scalar_lea.vmem %s2, %s324
        $region44: #{tpu_custom_call.1} parent=31 // pred_fallthru
          _
      $region32: #{tpu_custom_call.1} parent=5 // pred_fallthru
        _
      %p326 = scmp.le.s32.totalorder 1, %s25
      %p327 = scmp.lt.s32.totalorder %s25, 3
      %p328 = pnand %p326, %p327
      %p329 = pneg %p328
      // Predicated region
      $region45: #{tpu_custom_call.1} parent=5 // pred_check
        _
      $region46: #{tpu_custom_call.1} parent=5 // pred_check_branch
        %331 = sbr.rel (%p328) target = $region48
      $region47: #{tpu_custom_call.1} parent=5 // pred_region
        %s332 = ssub.s32 %s25, 1
        %s333 = sand.u32 %s64, 1
        %s334 = scalar_lea.sflag [#allocation3], %s333
        %s335 = sand.u32 %s64, 1
        %s336 = smul.addr %s335, 64
        %s337 = scalar_lea.vmem [#allocation2], %s336
        // Predicated region
        $region49: #{tpu_custom_call.1} parent=47 // pred_check
          %p338 = pneg %p77
        $region50: #{tpu_custom_call.1} parent=47 // pred_check_branch
          %340 = sbr.rel (%p338) target = $region52
        $region51: #{tpu_custom_call.1} parent=47 // pred_region
          %341 = dma.done %s334, 1024
        $region52: #{tpu_custom_call.1} parent=47 // pred_fallthru
          _
        // Predicated region
        $region53: #{tpu_custom_call.1} parent=47 // pred_check
          %p342 = pneg %p124
        $region54: #{tpu_custom_call.1} parent=47 // pred_check_branch
          %344 = sbr.rel (%p342) target = $region56
        $region55: #{tpu_custom_call.1} parent=47 // pred_region
          %345 = dma.done [#allocation6], 256
        $region56: #{tpu_custom_call.1} parent=47 // pred_fallthru
          _
        // Predicated region
        $region57: #{tpu_custom_call.1} parent=47 // pred_check
          %p346 = pneg %p145
        $region58: #{tpu_custom_call.1} parent=47 // pred_check_branch
          %348 = sbr.rel (%p346) target = $region60
        $region59: #{tpu_custom_call.1} parent=47 // pred_region
          %349 = dma.done [#allocation6], 256
        $region60: #{tpu_custom_call.1} parent=47 // pred_fallthru
          _
        %p350 = scmp.lt.s32.totalorder %s30, 1
        %s351 = scalar_select %p350, %s30, 1
        %s352 = smul.addr %s351, 8
        %s353 = scalar_lea.vmem %s0, %s352
        %p354 = pneg %p51
        %p355 = pneg %p48
        %s356 = sand.u32 %s64, 1
        %s357 = scalar_lea.sflag [#allocation3], %s356
        %s358 = sand.u32 %s64, 1
        %s359 = smul.addr %s358, 64
        %s360 = scalar_lea.vmem [#allocation2], %s359
        %p361 = pneg %p77
        %p362 = pneg %p74
        %p363 = scmp.lt.s32.totalorder %s30, 1
        %s364 = scalar_select %p363, %s30, 1
        %s365 = smul.addr %s364, 8
        %s366 = scalar_lea.vmem %s2, %s365
        %p367 = pneg %p103
        %p368 = pneg %p100
        %p369 = pneg %p124
        %p370 = pneg %p121
        %p371 = pneg %p145
        %p372 = pneg %p142
        %p373 = pneg %p166
        %p374 = pneg %p163
        %p375 = pneg %p187
        %p376 = pneg %p184
        %p377 = pneg %p213
        %p378 = pneg %p210
        %s379 = sand.u32 %s200, 1
        %s380 = scalar_lea.sflag [#allocation4], %s379
        %s381 = sand.u32 %s200, 1
        %s382 = smul.addr %s381, 8
        %s383 = scalar_lea.vmem [#allocation8], %s382
        %p384 = pneg %p239
        %p385 = pneg %p236
        %s386 = sand.u32 %s226, 1
        %s387 = scalar_lea.sflag [#allocation10], %s386
        %s388 = sand.u32 %s226, 1
        %s389 = smul.addr %s388, 8
        %s390 = scalar_lea.vmem [#allocation9], %s389
        %p391 = scmp.lt.s32.totalorder %s30, 1
        %s392 = scalar_select %p391, %s30, 1
        %s393 = smul.addr %s392, 8
        %s394 = scalar_lea.vmem %s0, %s393
        %s395 = smul.u32 8, %s30
        %p396 = scmp.lt.s32.totalorder %s30, 1
        %s397 = scalar_select %p396, %s30, 1
        %s398 = smul.addr %s397, 8
        %s399 = scalar_lea.vmem %s2, %s398
        %v401 = vld [vmem:[%s337] sm:$0xf]
        %v402 = vld [vmem:[%s337 + $0x4] sm:$0xf]
        %v403 = vld [vmem:[%s337 + $0x8] sm:$0xf]
        %v404 = vld [vmem:[%s337 + $0xc] sm:$0xf]
        %v405 = vld [vmem:[%s337 + $0x10] sm:$0xf]
        %v406 = vld [vmem:[%s337 + $0x14] sm:$0xf]
        %v407 = vld [vmem:[%s337 + $0x18] sm:$0xf]
        %v408 = vld [vmem:[%s337 + $0x1c] sm:$0xf]
        %v409 = vld [vmem:[%s337 + $0x20] sm:$0xf]
        %v410 = vld [vmem:[%s337 + $0x24] sm:$0xf]
        %v411 = vld [vmem:[%s337 + $0x28] sm:$0xf]
        %v412 = vld [vmem:[%s337 + $0x2c] sm:$0xf]
        %v413 = vld [vmem:[%s337 + $0x30] sm:$0xf]
        %v414 = vld [vmem:[%s337 + $0x34] sm:$0xf]
        %v415 = vld [vmem:[%s337 + $0x38] sm:$0xf]
        %v416 = vld [vmem:[%s337 + $0x3c] sm:$0xf]
        %v417 = vld [vmem:[#allocation7] sm:$0xf]
        %v418 = vld [vmem:[#allocation7 + $0x4] sm:$0xf]
        %v419 = vld [vmem:[#allocation7 + $0x8] sm:$0xf]
        %v420 = vld [vmem:[#allocation7 + $0xc] sm:$0xf]
        %v437 = vunpack.c.l.b16 %v401
        %v438 = vunpack.c.l.b16 %v402
        %v439 = vunpack.c.l.b16 %v403
        %v440 = vunpack.c.l.b16 %v404
        %v441 = vunpack.c.l.b16 %v405
        %v442 = vunpack.c.l.b16 %v406
        %v443 = vunpack.c.l.b16 %v407
        %v444 = vunpack.c.l.b16 %v408
        %v445 = vunpack.c.l.b16 %v409
        %v446 = vunpack.c.l.b16 %v410
        %v447 = vunpack.c.l.b16 %v411
        %v448 = vunpack.c.l.b16 %v412
        %v449 = vunpack.c.l.b16 %v413
        %v450 = vunpack.c.l.b16 %v414
        %v451 = vunpack.c.l.b16 %v415
        %v452 = vunpack.c.l.b16 %v416
        %v453 = vpack.c.b16 %v438, %v437
        %v454 = vpack.c.b16 %v440, %v439
        %v455 = vpack.c.b16 %v442, %v441
        %v456 = vpack.c.b16 %v444, %v443
        %v457 = vpack.c.b16 %v446, %v445
        %v458 = vpack.c.b16 %v448, %v447
        %v459 = vpack.c.b16 %v450, %v449
        %v460 = vpack.c.b16 %v452, %v451
        %v465 = vunpack.c.l.b16 %v417
        %v466 = vunpack.c.l.b16 %v418
        %v467 = vunpack.c.l.b16 %v419
        %v468 = vunpack.c.l.b16 %v420
        %v469 = vpack.c.b16 %v466, %v465
        %v470 = vpack.c.b16 %v468, %v467
        %vm473 = vcmask 261120
        %v475 = vsel %vm473, %v453, 0
        %v478 = vsel %vm473, %v454, 0
        %v481 = vsel %vm473, %v455, 0
        %v484 = vsel %vm473, %v456, 0
        %v487 = vsel %vm473, %v457, 0
        %v490 = vsel %vm473, %v458, 0
        %v493 = vsel %vm473, %v459, 0
        %v496 = vsel %vm473, %v460, 0
        %498 = vmatprep.subr.bf16.mxu0 0
        %499 = vmatpush1.bf16.msra.mxu0 0
        %500 = vmatprep.subr.bf16.mxu0 0
        %501 = vmatpush1.bf16.msra.mxu0 0
        %502 = vmatprep.subr.bf16.mxu0 0
        %503 = vmatpush1.bf16.msra.mxu0 0
        %504 = vmatprep.subr.bf16.mxu0 0
        %505 = vmatpush1.bf16.msra.mxu0 0
        %506 = vmatprep.subr.bf16.mxu0 0
        %507 = vmatpush1.bf16.msra.mxu0 0
        %508 = vmatprep.subr.bf16.mxu0 0
        %509 = vmatpush1.bf16.msra.mxu0 0
        %510 = vmatprep.subr.bf16.mxu0 0
        %511 = vmatpush1.bf16.msra.mxu0 %v470
        %512 = vmatprep.subr.bf16.mxu0 0
        %513 = vmatpush1.bf16.msra.mxu0 %v469
        %514 = vmatprep.subr.bf16.mxu0 0
        %515 = vmatpush2.bf16.msra.mxu0 0
        %516 = vmatprep.subr.bf16.mxu0 0
        %517 = vmatpush2.bf16.msra.mxu0 0
        %518 = vmatprep.subr.bf16.mxu0 0
        %519 = vmatpush2.bf16.msra.mxu0 0
        %520 = vmatprep.subr.bf16.mxu0 0
        %521 = vmatpush2.bf16.msra.mxu0 0
        %522 = vmatprep.subr.bf16.mxu0 0
        %523 = vmatpush2.bf16.msra.mxu0 0
        %524 = vmatprep.subr.bf16.mxu0 0
        %525 = vmatpush2.bf16.msra.mxu0 0
        %526 = vmatprep.subr.bf16.mxu0 0
        %527 = vmatpush2.bf16.msra.mxu0 0
        %528 = vmatprep.subr.bf16.mxu0 0
        %529 = vmatpush2.bf16.msra.mxu0 0
        %530 = vmatprep.mubr.bf16.mxu0 0
        %531 = vmatmul.mubr.bf16.gmra.mxu0 %v475
        %v532 = vpop.f32.mrf.mxu0
        %v533 = vadd.f32 0.0, %v532
        %v534 = vpop.f32.mrf.mxu0
        %v535 = vpop.f32.mrf.mxu0
        %v536 = vadd.f32 0.0, %v535
        %v537 = vpop.f32.mrf.mxu0
        %538 = vmatprep.mubr.bf16.mxu0 0
        %539 = vmatmul.mubr.bf16.gmra.mxu0 %v478
        %v540 = vpop.f32.mrf.mxu0
        %v541 = vadd.f32 0.0, %v540
        %v542 = vpop.f32.mrf.mxu0
        %v543 = vpop.f32.mrf.mxu0
        %v544 = vadd.f32 0.0, %v543
        %v545 = vpop.f32.mrf.mxu0
        %546 = vmatprep.mubr.bf16.mxu0 0
        %547 = vmatmul.mubr.bf16.gmra.mxu0 %v481
        %v548 = vpop.f32.mrf.mxu0
        %v549 = vadd.f32 0.0, %v548
        %v550 = vpop.f32.mrf.mxu0
        %v551 = vpop.f32.mrf.mxu0
        %v552 = vadd.f32 0.0, %v551
        %v553 = vpop.f32.mrf.mxu0
        %554 = vmatprep.mubr.bf16.mxu0 0
        %555 = vmatmul.mubr.bf16.gmra.mxu0 %v484
        %v556 = vpop.f32.mrf.mxu0
        %v557 = vadd.f32 0.0, %v556
        %v558 = vpop.f32.mrf.mxu0
        %v559 = vpop.f32.mrf.mxu0
        %v560 = vadd.f32 0.0, %v559
        %v561 = vpop.f32.mrf.mxu0
        %562 = vmatprep.mubr.bf16.mxu0 0
        %563 = vmatmul.mubr.bf16.gmra.mxu0 %v487
        %v564 = vpop.f32.mrf.mxu0
        %v565 = vadd.f32 0.0, %v564
        %v566 = vpop.f32.mrf.mxu0
        %v567 = vpop.f32.mrf.mxu0
        %v568 = vadd.f32 0.0, %v567
        %v569 = vpop.f32.mrf.mxu0
        %570 = vmatprep.mubr.bf16.mxu0 0
        %571 = vmatmul.mubr.bf16.gmra.mxu0 %v490
        %v572 = vpop.f32.mrf.mxu0
        %v573 = vadd.f32 0.0, %v572
        %v574 = vpop.f32.mrf.mxu0
        %v575 = vpop.f32.mrf.mxu0
        %v576 = vadd.f32 0.0, %v575
        %v577 = vpop.f32.mrf.mxu0
        %578 = vmatprep.mubr.bf16.mxu0 0
        %579 = vmatmul.mubr.bf16.gmra.mxu0 %v493
        %v580 = vpop.f32.mrf.mxu0
        %v581 = vadd.f32 0.0, %v580
        %v582 = vpop.f32.mrf.mxu0
        %v583 = vpop.f32.mrf.mxu0
        %v584 = vadd.f32 0.0, %v583
        %v585 = vpop.f32.mrf.mxu0
        %586 = vmatprep.mubr.bf16.mxu0 0
        %587 = vmatmul.mubr.bf16.gmra.mxu0 %v496
        %v588 = vpop.f32.mrf.mxu0
        %v589 = vadd.f32 0.0, %v588
        %v590 = vpop.f32.mrf.mxu0
        %v591 = vpop.f32.mrf.mxu0
        %v592 = vadd.f32 0.0, %v591
        %v593 = vpop.f32.mrf.mxu0
        %594 = vdwg.mxu0
        %v595 = vld [vmem:[%s394] sm:$0xff]
        %v596 = vpack.c.bf16 %v595, %v595
        %v597 = vld [vmem:[#allocation5] sm:$0xf]
        %v598 = vld [vmem:[#allocation5 + $0x4] sm:$0xf]
        %v599 = vld [vmem:[#allocation5 + $0x8] sm:$0xf]
        %v600 = vld [vmem:[#allocation5 + $0xc] sm:$0xf]
        %v601 = vld [vmem:[%s5] sm:$0x1]
        %v603 = vlaneseq
        %v604 = vshrl.u32 %v603, 7
        %v605 = vsub.s32 0, %v604
        %v606 = vrot.slane %v601, %v605
        %v612 = vunpack.c.l.b16 %v597
        %v613 = vunpack.c.l.b16 %v598
        %v614 = vunpack.c.l.b16 %v599
        %v615 = vunpack.c.l.b16 %v600
        %v616 = vpack.c.b16 %v613, %v612
        %v617 = vpack.c.b16 %v615, %v614
        %v621 = vsel %vm473, %v596, 0
        %623 = vmatprep.subr.bf16.mxu0 0
        %624 = vmatpush1.bf16.msra.mxu0 0
        %625 = vmatprep.subr.bf16.mxu0 0
        %626 = vmatpush1.bf16.msra.mxu0 0
        %627 = vmatprep.subr.bf16.mxu0 0
        %628 = vmatpush1.bf16.msra.mxu0 0
        %629 = vmatprep.subr.bf16.mxu0 0
        %630 = vmatpush1.bf16.msra.mxu0 0
        %631 = vmatprep.subr.bf16.mxu0 0
        %632 = vmatpush1.bf16.msra.mxu0 0
        %633 = vmatprep.subr.bf16.mxu0 0
        %634 = vmatpush1.bf16.msra.mxu0 0
        %635 = vmatprep.subr.bf16.mxu0 0
        %636 = vmatpush1.bf16.msra.mxu0 %v617
        %637 = vmatprep.subr.bf16.mxu0 0
        %638 = vmatpush1.bf16.msra.mxu0 %v616
        %639 = vmatprep.subr.bf16.mxu0 0
        %640 = vmatpush2.bf16.msra.mxu0 0
        %641 = vmatprep.subr.bf16.mxu0 0
        %642 = vmatpush2.bf16.msra.mxu0 0
        %643 = vmatprep.subr.bf16.mxu0 0
        %644 = vmatpush2.bf16.msra.mxu0 0
        %645 = vmatprep.subr.bf16.mxu0 0
        %646 = vmatpush2.bf16.msra.mxu0 0
        %647 = vmatprep.subr.bf16.mxu0 0
        %648 = vmatpush2.bf16.msra.mxu0 0
        %649 = vmatprep.subr.bf16.mxu0 0
        %650 = vmatpush2.bf16.msra.mxu0 0
        %651 = vmatprep.subr.bf16.mxu0 0
        %652 = vmatpush2.bf16.msra.mxu0 0
        %653 = vmatprep.subr.bf16.mxu0 0
        %654 = vmatpush2.bf16.msra.mxu0 0
        %655 = vmatprep.mubr.bf16.mxu0 0
        %656 = vmatmul.mubr.bf16.gmra.mxu0 %v621
        %v657 = vpop.f32.mrf.mxu0
        %v658 = vadd.f32 %v606, %v657
        %v659 = vpop.f32.mrf.mxu0
        %v660 = vpop.f32.mrf.mxu0
        %v661 = vpop.f32.mrf.mxu0
        %662 = vdwg.mxu0
        %v664 = vcombine.high %v658, %v658
        %v666 = vunpack.c.l.s4 1966171168
        %v667 = vunpack.c.0.s8 %v666
        %v668 = vlaneseq
        %v669 = vshrl.u32 %v668, 7
        %v670 = vsub.s32 %v667, %v669
        %v671 = vrot.slane %v658, %v670
        %v673 = vunpack.c.l.s4 1966171168
        %v674 = vunpack.c.0.s8 %v673
        %v675 = vlaneseq
        %v676 = vshrl.u32 %v675, 7
        %v677 = vsub.s32 %v674, %v676
        %v678 = vrot.slane %v664, %v677
        %v679 = vcombine.high %v671, %v671
        %v680 = vcombine.high %v678, %v678
        %v682 = vunpack.c.l.s4 1966171168
        %v683 = vunpack.c.0.s8 %v682
        %v684 = vlaneseq
        %v685 = vshrl.u32 %v684, 7
        %v686 = vsub.s32 %v683, %v685
        %v687 = vrot.slane %v671, %v686
        %v689 = vunpack.c.l.s4 1966171168
        %v690 = vunpack.c.0.s8 %v689
        %v691 = vlaneseq
        %v692 = vshrl.u32 %v691, 7
        %v693 = vsub.s32 %v690, %v692
        %v694 = vrot.slane %v678, %v693
        %v696 = vunpack.c.l.s4 1966171168
        %v697 = vunpack.c.0.s8 %v696
        %v698 = vlaneseq
        %v699 = vshrl.u32 %v698, 7
        %v700 = vsub.s32 %v697, %v699
        %v701 = vrot.slane %v679, %v700
        %v703 = vunpack.c.l.s4 1966171168
        %v704 = vunpack.c.0.s8 %v703
        %v705 = vlaneseq
        %v706 = vshrl.u32 %v705, 7
        %v707 = vsub.s32 %v704, %v706
        %v708 = vrot.slane %v680, %v707
        %v709 = vcombine.high %v687, %v687
        %v710 = vcombine.high %v694, %v694
        %v711 = vcombine.high %v701, %v701
        %v712 = vcombine.high %v708, %v708
        %v713 = vlaneseq
        %v714 = vshrl.u32 %v713, 7
        %v715 = vsub.s32 0, %v714
        %v716 = vrot.slane %v687, %v715
        %v717 = vlaneseq
        %v718 = vshrl.u32 %v717, 7
        %v719 = vsub.s32 0, %v718
        %v720 = vrot.slane %v701, %v719
        %v721 = vlaneseq
        %v722 = vshrl.u32 %v721, 7
        %v723 = vsub.s32 0, %v722
        %v724 = vrot.slane %v709, %v723
        %v725 = vlaneseq
        %v726 = vshrl.u32 %v725, 7
        %v727 = vsub.s32 0, %v726
        %v728 = vrot.slane %v711, %v727
        %v729 = vlaneseq
        %v730 = vshrl.u32 %v729, 7
        %v731 = vsub.s32 0, %v730
        %v732 = vrot.slane %v694, %v731
        %v733 = vlaneseq
        %v734 = vshrl.u32 %v733, 7
        %v735 = vsub.s32 0, %v734
        %v736 = vrot.slane %v708, %v735
        %v737 = vlaneseq
        %v738 = vshrl.u32 %v737, 7
        %v739 = vsub.s32 0, %v738
        %v740 = vrot.slane %v710, %v739
        %v741 = vlaneseq
        %v742 = vshrl.u32 %v741, 7
        %v743 = vsub.s32 0, %v742
        %v744 = vrot.slane %v712, %v743
        %v753 = vadd.f32 %v716, %v533
        %v754 = vadd.f32 %v716, %v536
        %v755 = vadd.f32 %v720, %v541
        %v756 = vadd.f32 %v720, %v544
        %v757 = vadd.f32 %v724, %v549
        %v758 = vadd.f32 %v724, %v552
        %v759 = vadd.f32 %v728, %v557
        %v760 = vadd.f32 %v728, %v560
        %v761 = vadd.f32 %v732, %v565
        %v762 = vadd.f32 %v732, %v568
        %v763 = vadd.f32 %v736, %v573
        %v764 = vadd.f32 %v736, %v576
        %v765 = vadd.f32 %v740, %v581
        %v766 = vadd.f32 %v740, %v584
        %v767 = vadd.f32 %v744, %v589
        %v768 = vadd.f32 %v744, %v592
        %v769 = vtanh.pop %v753
        %v770 = vtanh.pop %v754
        %v771 = vtanh.pop %v755
        %v772 = vtanh.pop %v756
        %v773 = vtanh.pop %v757
        %v774 = vtanh.pop %v758
        %v775 = vtanh.pop %v759
        %v776 = vtanh.pop %v760
        %v777 = vtanh.pop %v761
        %v778 = vtanh.pop %v762
        %v779 = vtanh.pop %v763
        %v780 = vtanh.pop %v764
        %v781 = vtanh.pop %v765
        %v782 = vtanh.pop %v766
        %v783 = vtanh.pop %v767
        %v784 = vtanh.pop %v768
        %v785 = vld [vmem:[%s6] sm:$0x1]
        %v787 = vlaneseq
        %v788 = vshrl.u32 %v787, 7
        %v789 = vsub.s32 0, %v788
        %v790 = vrot.slane %v785, %v789
        %v792 = vmul.f32 %v769, %v790
        %v793 = vmul.f32 %v770, %v790
        %v794 = vmul.f32 %v771, %v790
        %v795 = vmul.f32 %v772, %v790
        %v796 = vmul.f32 %v773, %v790
        %v797 = vmul.f32 %v774, %v790
        %v798 = vmul.f32 %v775, %v790
        %v799 = vmul.f32 %v776, %v790
        %v800 = vmul.f32 %v777, %v790
        %v801 = vmul.f32 %v778, %v790
        %v802 = vmul.f32 %v779, %v790
        %v803 = vmul.f32 %v780, %v790
        %v804 = vmul.f32 %v781, %v790
        %v805 = vmul.f32 %v782, %v790
        %v806 = vmul.f32 %v783, %v790
        %v807 = vmul.f32 %v784, %v790
        %v808 = vsel %vm473, %v792, 0.0
        %809 = vadd.xlane.f32.xlu0 %v808
        %v810 = vpop.xlane.xlu0 %809
        %v811 = vsel %vm473, %v793, 0.0
        %812 = vadd.xlane.f32.xlu0 %v811
        %v813 = vpop.xlane.xlu0 %812
        %v814 = vsel %vm473, %v794, 0.0
        %815 = vadd.xlane.f32.xlu0 %v814
        %v816 = vpop.xlane.xlu0 %815
        %v817 = vsel %vm473, %v795, 0.0
        %818 = vadd.xlane.f32.xlu0 %v817
        %v819 = vpop.xlane.xlu0 %818
        %v820 = vsel %vm473, %v796, 0.0
        %821 = vadd.xlane.f32.xlu0 %v820
        %v822 = vpop.xlane.xlu0 %821
        %v823 = vsel %vm473, %v797, 0.0
        %824 = vadd.xlane.f32.xlu0 %v823
        %v825 = vpop.xlane.xlu0 %824
        %v826 = vsel %vm473, %v798, 0.0
        %827 = vadd.xlane.f32.xlu0 %v826
        %v828 = vpop.xlane.xlu0 %827
        %v829 = vsel %vm473, %v799, 0.0
        %830 = vadd.xlane.f32.xlu0 %v829
        %v831 = vpop.xlane.xlu0 %830
        %v832 = vsel %vm473, %v800, 0.0
        %833 = vadd.xlane.f32.xlu0 %v832
        %v834 = vpop.xlane.xlu0 %833
        %v835 = vsel %vm473, %v801, 0.0
        %836 = vadd.xlane.f32.xlu0 %v835
        %v837 = vpop.xlane.xlu0 %836
        %v838 = vsel %vm473, %v802, 0.0
        %839 = vadd.xlane.f32.xlu0 %v838
        %v840 = vpop.xlane.xlu0 %839
        %v841 = vsel %vm473, %v803, 0.0
        %842 = vadd.xlane.f32.xlu0 %v841
        %v843 = vpop.xlane.xlu0 %842
        %v844 = vsel %vm473, %v804, 0.0
        %845 = vadd.xlane.f32.xlu0 %v844
        %v846 = vpop.xlane.xlu0 %845
        %v847 = vsel %vm473, %v805, 0.0
        %848 = vadd.xlane.f32.xlu0 %v847
        %v849 = vpop.xlane.xlu0 %848
        %v850 = vsel %vm473, %v806, 0.0
        %851 = vadd.xlane.f32.xlu0 %v850
        %v852 = vpop.xlane.xlu0 %851
        %v853 = vsel %vm473, %v807, 0.0
        %854 = vadd.xlane.f32.xlu0 %v853
        %v855 = vpop.xlane.xlu0 %854
        %v856 = vlaneseq
        %v857 = vand.u32 %v856, 127
        %v858 = vld [vmem:[%s399] sm:$0xff]
        %859 = vset.pattern.permute.xlu0 0
        %860 = vperm.xlu0 %859, %v858
        %v861 = vpop.permute.xlu0 %860
        %vm862 = vcmp.lt.s32.totalorder %v857, %v861
        %v879 = vlaneseq
        %v880 = vshrl.u32 %v879, 7
        %v881 = vsub.s32 %v857, %v880
        %v882 = vrot.slane %v810, %v881
        %v883 = vadd.s32 %v857, 4294967288
        %v884 = vlaneseq
        %v885 = vshrl.u32 %v884, 7
        %v886 = vsub.s32 %v883, %v885
        %v887 = vrot.slane %v813, %v886
        %vm888 = vcmask 130112
        %v889 = vsel %vm888, %v887, %v882
        %v890 = vlaneseq
        %v891 = vshrl.u32 %v890, 7
        %v892 = vsub.s32 %v857, %v891
        %v893 = vrot.slane %v816, %v892
        %v894 = vlaneseq
        %v895 = vshrl.u32 %v894, 7
        %v896 = vsub.s32 %v883, %v895
        %v897 = vrot.slane %v819, %v896
        %v898 = vsel %vm888, %v897, %v893
        %v899 = vlaneseq
        %v900 = vshrl.u32 %v899, 7
        %v901 = vsub.s32 %v857, %v900
        %v902 = vrot.slane %v822, %v901
        %v903 = vlaneseq
        %v904 = vshrl.u32 %v903, 7
        %v905 = vsub.s32 %v883, %v904
        %v906 = vrot.slane %v825, %v905
        %v907 = vsel %vm888, %v906, %v902
        %v908 = vlaneseq
        %v909 = vshrl.u32 %v908, 7
        %v910 = vsub.s32 %v857, %v909
        %v911 = vrot.slane %v828, %v910
        %v912 = vlaneseq
        %v913 = vshrl.u32 %v912, 7
        %v914 = vsub.s32 %v883, %v913
        %v915 = vrot.slane %v831, %v914
        %v916 = vsel %vm888, %v915, %v911
        %v917 = vlaneseq
        %v918 = vshrl.u32 %v917, 7
        %v919 = vsub.s32 %v857, %v918
        %v920 = vrot.slane %v834, %v919
        %v921 = vlaneseq
        %v922 = vshrl.u32 %v921, 7
        %v923 = vsub.s32 %v883, %v922
        %v924 = vrot.slane %v837, %v923
        %v925 = vsel %vm888, %v924, %v920
        %v926 = vlaneseq
        %v927 = vshrl.u32 %v926, 7
        %v928 = vsub.s32 %v857, %v927
        %v929 = vrot.slane %v840, %v928
        %v930 = vlaneseq
        %v931 = vshrl.u32 %v930, 7
        %v932 = vsub.s32 %v883, %v931
        %v933 = vrot.slane %v843, %v932
        %v934 = vsel %vm888, %v933, %v929
        %v935 = vlaneseq
        %v936 = vshrl.u32 %v935, 7
        %v937 = vsub.s32 %v857, %v936
        %v938 = vrot.slane %v846, %v937
        %v939 = vlaneseq
        %v940 = vshrl.u32 %v939, 7
        %v941 = vsub.s32 %v883, %v940
        %v942 = vrot.slane %v849, %v941
        %v943 = vsel %vm888, %v942, %v938
        %v944 = vlaneseq
        %v945 = vshrl.u32 %v944, 7
        %v946 = vsub.s32 %v857, %v945
        %v947 = vrot.slane %v852, %v946
        %v948 = vlaneseq
        %v949 = vshrl.u32 %v948, 7
        %v950 = vsub.s32 %v883, %v949
        %v951 = vrot.slane %v855, %v950
        %v952 = vsel %vm888, %v951, %v947
        %vm953 = vcmask 1041409
        %v954 = vsel %vm953, %v898, %v889
        %vm955 = vcmask 1042434
        %v956 = vsel %vm955, %v907, %v954
        %vm957 = vcmask 1043459
        %v958 = vsel %vm957, %v916, %v956
        %vm959 = vcmask 1044484
        %v960 = vsel %vm959, %v925, %v958
        %vm961 = vcmask 1045509
        %v962 = vsel %vm961, %v934, %v960
        %vm963 = vcmask 1046534
        %v964 = vsel %vm963, %v943, %v962
        %vm965 = vcmask 1047559
        %v966 = vsel %vm965, %v952, %v964
        %v968 = vsel %vm862, %v966, -1e+30
        %vm969 = vcmask 130048
        %v970 = vsel %vm969, %v968, -inf
        %971 = vmax.xlane.f32.xlu0 %v970
        %v972 = vpop.xlane.xlu0 %971
        %v973 = vsub.f32 %v968, %v972
        %v974 = vmul.f32 %v973, 1.442695
        %v975 = vpow.pop %v974
        %v976 = vsel %vm969, %v975, 0.0
        %977 = vadd.xlane.f32.xlu0 %v976
        %v978 = vpop.xlane.xlu0 %977
        %v979 = vrcp.pop %v978
        %v980 = vmul.f32 %v975, %v979
        %v981 = vlaneseq
        %v982 = vshrl.u32 %v981, 7
        %v983 = vsub.s32 0, %v982
        %v984 = vrot.slane %v980, %v983
        %986 = vbcast.lane.b32.xlu0 %v984, 256
        %v987 = vpop.permute.xlu0 %986
        %s989 = sor.u32 256, 8
        %990 = vbcast.lane.b32.xlu0 %v984, %s989
        %v991 = vpop.permute.xlu0 %990
        %v992 = vlaneseq
        %v993 = vshrl.u32 %v992, 7
        %v994 = vsub.s32 1, %v993
        %v995 = vrot.slane %v980, %v994
        %997 = vbcast.lane.b32.xlu0 %v995, 256
        %v998 = vpop.permute.xlu0 %997
        %s1000 = sor.u32 256, 8
        %1001 = vbcast.lane.b32.xlu0 %v995, %s1000
        %v1002 = vpop.permute.xlu0 %1001
        %v1003 = vlaneseq
        %v1004 = vshrl.u32 %v1003, 7
        %v1005 = vsub.s32 2, %v1004
        %v1006 = vrot.slane %v980, %v1005
        %1008 = vbcast.lane.b32.xlu0 %v1006, 256
        %v1009 = vpop.permute.xlu0 %1008
        %s1011 = sor.u32 256, 8
        %1012 = vbcast.lane.b32.xlu0 %v1006, %s1011
        %v1013 = vpop.permute.xlu0 %1012
        %v1014 = vlaneseq
        %v1015 = vshrl.u32 %v1014, 7
        %v1016 = vsub.s32 3, %v1015
        %v1017 = vrot.slane %v980, %v1016
        %1019 = vbcast.lane.b32.xlu0 %v1017, 256
        %v1020 = vpop.permute.xlu0 %1019
        %s1022 = sor.u32 256, 8
        %1023 = vbcast.lane.b32.xlu0 %v1017, %s1022
        %v1024 = vpop.permute.xlu0 %1023
        %v1025 = vlaneseq
        %v1026 = vshrl.u32 %v1025, 7
        %v1027 = vsub.s32 4, %v1026
        %v1028 = vrot.slane %v980, %v1027
        %1030 = vbcast.lane.b32.xlu0 %v1028, 256
        %v1031 = vpop.permute.xlu0 %1030
        %s1033 = sor.u32 256, 8
        %1034 = vbcast.lane.b32.xlu0 %v1028, %s1033
        %v1035 = vpop.permute.xlu0 %1034
        %v1036 = vlaneseq
        %v1037 = vshrl.u32 %v1036, 7
        %v1038 = vsub.s32 5, %v1037
        %v1039 = vrot.slane %v980, %v1038
        %1041 = vbcast.lane.b32.xlu0 %v1039, 256
        %v1042 = vpop.permute.xlu0 %1041
        %s1044 = sor.u32 256, 8
        %1045 = vbcast.lane.b32.xlu0 %v1039, %s1044
        %v1046 = vpop.permute.xlu0 %1045
        %v1047 = vlaneseq
        %v1048 = vshrl.u32 %v1047, 7
        %v1049 = vsub.s32 6, %v1048
        %v1050 = vrot.slane %v980, %v1049
        %1052 = vbcast.lane.b32.xlu0 %v1050, 256
        %v1053 = vpop.permute.xlu0 %1052
        %s1055 = sor.u32 256, 8
        %1056 = vbcast.lane.b32.xlu0 %v1050, %s1055
        %v1057 = vpop.permute.xlu0 %1056
        %v1058 = vlaneseq
        %v1059 = vshrl.u32 %v1058, 7
        %v1060 = vsub.s32 7, %v1059
        %v1061 = vrot.slane %v980, %v1060
        %1063 = vbcast.lane.b32.xlu0 %v1061, 256
        %v1064 = vpop.permute.xlu0 %1063
        %s1066 = sor.u32 256, 8
        %1067 = vbcast.lane.b32.xlu0 %v1061, %s1066
        %v1068 = vpop.permute.xlu0 %1067
        %v1069 = vunpack.c.l.bf16 %v401
        %v1070 = vunpack.c.l.bf16 %v402
        %v1071 = vunpack.c.l.bf16 %v403
        %v1072 = vunpack.c.l.bf16 %v404
        %v1073 = vunpack.c.l.bf16 %v405
        %v1074 = vunpack.c.l.bf16 %v406
        %v1075 = vunpack.c.l.bf16 %v407
        %v1076 = vunpack.c.l.bf16 %v408
        %v1077 = vunpack.c.l.bf16 %v409
        %v1078 = vunpack.c.l.bf16 %v410
        %v1079 = vunpack.c.l.bf16 %v411
        %v1080 = vunpack.c.l.bf16 %v412
        %v1081 = vunpack.c.l.bf16 %v413
        %v1082 = vunpack.c.l.bf16 %v414
        %v1083 = vunpack.c.l.bf16 %v415
        %v1084 = vunpack.c.l.bf16 %v416
        %v1085 = vmul.f32 %v987, %v1069
        %v1086 = vmul.f32 %v991, %v1070
        %v1087 = vmul.f32 %v998, %v1071
        %v1088 = vmul.f32 %v1002, %v1072
        %v1089 = vmul.f32 %v1009, %v1073
        %v1090 = vmul.f32 %v1013, %v1074
        %v1091 = vmul.f32 %v1020, %v1075
        %v1092 = vmul.f32 %v1024, %v1076
        %v1093 = vmul.f32 %v1031, %v1077
        %v1094 = vmul.f32 %v1035, %v1078
        %v1095 = vmul.f32 %v1042, %v1079
        %v1096 = vmul.f32 %v1046, %v1080
        %v1097 = vmul.f32 %v1053, %v1081
        %v1098 = vmul.f32 %v1057, %v1082
        %v1099 = vmul.f32 %v1064, %v1083
        %v1100 = vmul.f32 %v1068, %v1084
        %v1101 = vsel %vm473, %v1085, 0.0
        %v1102 = vsel %vm473, %v1086, 0.0
        %v1103 = vadd.f32 %v1101, %v1102
        %v1104 = vrot.slane %v1103, 4
        %v1105 = vadd.f32 %v1103, %v1104
        %v1106 = vrot.slane %v1105, 2
        %v1107 = vadd.f32 %v1105, %v1106
        %v1108 = vrot.slane %v1107, 1
        %v1109 = vadd.f32 %v1107, %v1108
        %v1110 = vsel %vm473, %v1087, 0.0
        %v1111 = vsel %vm473, %v1088, 0.0
        %v1112 = vadd.f32 %v1110, %v1111
        %v1113 = vrot.slane %v1112, 4
        %v1114 = vadd.f32 %v1112, %v1113
        %v1115 = vrot.slane %v1114, 2
        %v1116 = vadd.f32 %v1114, %v1115
        %v1117 = vrot.slane %v1116, 1
        %v1118 = vadd.f32 %v1116, %v1117
        %v1119 = vsel %vm473, %v1089, 0.0
        %v1120 = vsel %vm473, %v1090, 0.0
        %v1121 = vadd.f32 %v1119, %v1120
        %v1122 = vrot.slane %v1121, 4
        %v1123 = vadd.f32 %v1121, %v1122
        %v1124 = vrot.slane %v1123, 2
        %v1125 = vadd.f32 %v1123, %v1124
        %v1126 = vrot.slane %v1125, 1
        %v1127 = vadd.f32 %v1125, %v1126
        %v1128 = vsel %vm473, %v1091, 0.0
        %v1129 = vsel %vm473, %v1092, 0.0
        %v1130 = vadd.f32 %v1128, %v1129
        %v1131 = vrot.slane %v1130, 4
        %v1132 = vadd.f32 %v1130, %v1131
        %v1133 = vrot.slane %v1132, 2
        %v1134 = vadd.f32 %v1132, %v1133
        %v1135 = vrot.slane %v1134, 1
        %v1136 = vadd.f32 %v1134, %v1135
        %v1137 = vsel %vm473, %v1093, 0.0
        %v1138 = vsel %vm473, %v1094, 0.0
        %v1139 = vadd.f32 %v1137, %v1138
        %v1140 = vrot.slane %v1139, 4
        %v1141 = vadd.f32 %v1139, %v1140
        %v1142 = vrot.slane %v1141, 2
        %v1143 = vadd.f32 %v1141, %v1142
        %v1144 = vrot.slane %v1143, 1
        %v1145 = vadd.f32 %v1143, %v1144
        %v1146 = vsel %vm473, %v1095, 0.0
        %v1147 = vsel %vm473, %v1096, 0.0
        %v1148 = vadd.f32 %v1146, %v1147
        %v1149 = vrot.slane %v1148, 4
        %v1150 = vadd.f32 %v1148, %v1149
        %v1151 = vrot.slane %v1150, 2
        %v1152 = vadd.f32 %v1150, %v1151
        %v1153 = vrot.slane %v1152, 1
        %v1154 = vadd.f32 %v1152, %v1153
        %v1155 = vsel %vm473, %v1097, 0.0
        %v1156 = vsel %vm473, %v1098, 0.0
        %v1157 = vadd.f32 %v1155, %v1156
        %v1158 = vrot.slane %v1157, 4
        %v1159 = vadd.f32 %v1157, %v1158
        %v1160 = vrot.slane %v1159, 2
        %v1161 = vadd.f32 %v1159, %v1160
        %v1162 = vrot.slane %v1161, 1
        %v1163 = vadd.f32 %v1161, %v1162
        %v1164 = vsel %vm473, %v1099, 0.0
        %v1165 = vsel %vm473, %v1100, 0.0
        %v1166 = vadd.f32 %v1164, %v1165
        %v1167 = vrot.slane %v1166, 4
        %v1168 = vadd.f32 %v1166, %v1167
        %v1169 = vrot.slane %v1168, 2
        %v1170 = vadd.f32 %v1168, %v1169
        %v1171 = vrot.slane %v1170, 1
        %v1172 = vadd.f32 %v1170, %v1171
        %v1181 = vsel %vm953, %v1118, %v1109
        %v1182 = vsel %vm955, %v1127, %v1181
        %v1183 = vsel %vm957, %v1136, %v1182
        %v1184 = vsel %vm959, %v1145, %v1183
        %v1185 = vsel %vm961, %v1154, %v1184
        %v1186 = vsel %vm963, %v1163, %v1185
        %v1187 = vsel %vm965, %v1172, %v1186
        %1189 = vst.msk [vmem:[%s383] sm:$0xff] %vm473, %v1187
        %1190 = vst.msk [vmem:[%s390] sm:$0xff] %vm969, %v980
        %s1191 = sand.u32 %s200, 1
        %s1192 = scalar_lea.sflag [#allocation4], %s1191
        %s1193 = sand.u32 %s200, 1
        %s1194 = smul.addr %s1193, 8
        %s1195 = scalar_lea.vmem [#allocation8], %s1194
        %s1196 = sand.u32 %s226, 1
        %s1197 = scalar_lea.sflag [#allocation10], %s1196
        %s1198 = sand.u32 %s226, 1
        %s1199 = smul.addr %s1198, 8
        %s1200 = scalar_lea.vmem [#allocation9], %s1199
        // Predicated region
        $region61: #{tpu_custom_call.1} parent=47 // pred_check
          %p1201 = pneg %p210
        $region62: #{tpu_custom_call.1} parent=47 // pred_check_branch
          %1203 = sbr.rel (%p1201) target = $region64
        $region63: #{tpu_custom_call.1} parent=47 // pred_region
          %s1205 = ssub.s32 128, 128
          %1206 = vsyncadd %s1192, %s1205
          %s1207 = smul.addr %s30, 128
          %s1208 = scalar_lea.hbm %s7, %s1207
          %s1210 = sshll.u32 %s1195, 4
          %s1211 = int_to_ptr.vmem [resolvable:$true] %s1210
          %1213 = dma.vmem_to_hbm [thread:$0]  %s1211, 128, %s1208, %s1192
        $region64: #{tpu_custom_call.1} parent=47 // pred_fallthru
          _
        // Predicated region
        $region65: #{tpu_custom_call.1} parent=47 // pred_check
          %p1214 = pneg %p236
        $region66: #{tpu_custom_call.1} parent=47 // pred_check_branch
          %1216 = sbr.rel (%p1214) target = $region68
        $region67: #{tpu_custom_call.1} parent=47 // pred_region
          %s1218 = ssub.s32 128, 128
          %1219 = vsyncadd %s1197, %s1218
          %s1220 = smul.addr %s30, 128
          %s1221 = scalar_lea.hbm %s8, %s1220
          %s1223 = sshll.u32 %s1200, 4
          %s1224 = int_to_ptr.vmem [resolvable:$true] %s1223
          %1226 = dma.vmem_to_hbm [thread:$0]  %s1224, 128, %s1221, %s1197
        $region68: #{tpu_custom_call.1} parent=47 // pred_fallthru
          _
      $region48: #{tpu_custom_call.1} parent=5 // pred_fallthru
        _
      %p1227 = scmp.le.s32.totalorder 2, %s25
      // Predicated region
      $region69: #{tpu_custom_call.1} parent=5 // pred_check
        %p1228 = pneg %p1227
      $region70: #{tpu_custom_call.1} parent=5 // pred_check_branch
        %1230 = sbr.rel (%p1228) target = $region72
      $region71: #{tpu_custom_call.1} parent=5 // pred_region
        %s1231 = ssub.s32 %s25, 2
        // Predicated region
        $region73: #{tpu_custom_call.1} parent=71 // pred_check
          %p1232 = pneg %p216
        $region74: #{tpu_custom_call.1} parent=71 // pred_check_branch
          %1234 = sbr.rel (%p1232) target = $region76
        $region75: #{tpu_custom_call.1} parent=71 // pred_region
          %s1235 = sand.u32 %s201, 1
          %s1236 = scalar_lea.sflag [#allocation4], %s1235
          %s1237 = sand.u32 %s201, 1
          %s1238 = smul.addr %s1237, 8
          %s1239 = scalar_lea.vmem [#allocation8], %s1238
          %1240 = dma.done %s1236, 128
        $region76: #{tpu_custom_call.1} parent=71 // pred_fallthru
          _
        // Predicated region
        $region77: #{tpu_custom_call.1} parent=71 // pred_check
          %p1241 = pneg %p242
        $region78: #{tpu_custom_call.1} parent=71 // pred_check_branch
          %1243 = sbr.rel (%p1241) target = $region80
        $region79: #{tpu_custom_call.1} parent=71 // pred_region
          %s1244 = sand.u32 %s227, 1
          %s1245 = scalar_lea.sflag [#allocation10], %s1244
          %s1246 = sand.u32 %s227, 1
          %s1247 = smul.addr %s1246, 8
          %s1248 = scalar_lea.vmem [#allocation9], %s1247
          %1249 = dma.done %s1245, 128
        $region80: #{tpu_custom_call.1} parent=71 // pred_fallthru
          _
      $region72: #{tpu_custom_call.1} parent=5 // pred_fallthru
        _
    $region6: #{tpu_custom_call.1} parent=1 // loop_footer
      %s29 = sadd.s32 1, %s25
    $region7: #{tpu_custom_call.1} parent=1 // loop_footer_branch
      %24 = sbr.rel target = $region3
    $region8: #{tpu_custom_call.1} parent=1 // loop_exit
      _
    %1250 = vsyncpa [#allocation3], 1
    %s1251 = scalar_lea.sflag [#allocation3], 1
    %1252 = vsyncpa %s1251, 1
    %1253 = vsyncpa [#allocation6], 1
    %1254 = vsyncpa [#allocation4], 1
    %s1255 = scalar_lea.sflag [#allocation4], 1
    %1256 = vsyncpa %s1255, 1
    %1257 = vsyncpa [#allocation10], 1
    %s1258 = scalar_lea.sflag [#allocation10], 1
    %1259 = vsyncpa %s1258, 1

</llo_original>
